<compile_context>
chip_gen: v5e
topology: v5e:2x2
jax: 0.10.0
libtpu: 0.0.40
codegen_flags: <defaults>
</compile_context>

<pallas_src>
import jax
import jax.numpy as jnp
from jax import lax
from jax.experimental import pallas as pl
from jax.experimental.pallas import tpu as pltpu


_INV_SQRT2 = 0.7071067811865476  # 1/sqrt(2), hoisted constant for exact GELU


def _round_up(x, m):
    return ((x + m - 1) // m) * m


def _vmem_capacity_bytes():
    """Physical VMEM of the current TPU generation (conservative fallback)."""
    try:
        return int(pltpu.get_tpu_info().vmem_capacity_bytes)
    except Exception:
        return 64 << 20  # v7x-safe default


def _swin_intermediate_kernel(x_ref, w_ref, b_ref, o_ref):
    # x_ref: [TM, K] native dtype    w_ref: [K, N] bf16
    # b_ref: [1, N] f32              o_ref: [TM, N] out dtype
    x = x_ref[...].astype(jnp.bfloat16)          # in-kernel cast (no HBM pass)
    y = jnp.dot(x, w_ref[...], preferred_element_type=jnp.float32)
    y = y + b_ref[...]
    # exact GELU (matches ACT2FN["gelu"] / torch.nn.functional.gelu default)
    g = 0.5 * y * (1.0 + lax.erf(y * _INV_SQRT2))
    o_ref[...] = g.astype(o_ref.dtype)


def swin_intermediate(hidden_states, weight, bias, *, tm=512, out_dtype=None):
    """Fused Linear(dim -> mlp_ratio*dim) + exact GELU.

    hidden_states: [B, S, dim]
    weight:        [dim, hidden]   (transpose of nn.Linear's [hidden, dim] weight)
    bias:          [hidden]
    returns:       [B, S, hidden] in `out_dtype` (defaults to input dtype)
    """
    B, S, K = hidden_states.shape
    N = weight.shape[1]
    M = B * S

    out_dtype = hidden_states.dtype if out_dtype is None else out_dtype
    out_itemsize = jnp.dtype(out_dtype).itemsize
    x_itemsize = jnp.dtype(hidden_states.dtype).itemsize

    # ----- generation-aware tile selection -------------------------------
    vmem_cap = _vmem_capacity_bytes()
    vmem_budget_cap = (vmem_cap * 3) // 4          # headroom for Mosaic scratch
    fixed_bytes = 2 * K * N * 2 + 2 * N * 4        # dbl-buffered bf16 W + f32 b
    per_row_bytes = 2 * K * x_itemsize + 2 * N * out_itemsize

    if M < 8:
        tm = M                                     # block == full array dim
    else:
        # keep grid_m >= 2 so v7x's two TensorCores both get work
        tm = min(tm, _round_up(pl.cdiv(M, 2), 8))
        # shrink further only if the double-buffered tiles would not fit VMEM
        tm_fit = max(8, (vmem_budget_cap - fixed_bytes) // max(per_row_bytes, 1))
        tm = max(8, min(tm, (tm_fit // 8) * 8))

    grid_m = pl.cdiv(M, tm)

    vmem_bytes = fixed_bytes + per_row_bytes * tm
    vmem_limit = int(min(max(vmem_bytes + (4 << 20), 16 << 20), vmem_cap))

    # ----- operands (no extra HBM passes on the [M, *] slabs) ------------
    x2d = hidden_states.reshape(M, K)              # free (contiguous reshape)
    w_bf16 = weight.astype(jnp.bfloat16)           # one-time small K*N cast
    b2d = bias.reshape(1, N).astype(jnp.float32)

    cost = pl.CostEstimate(
        flops=2 * M * N * K,
        transcendentals=M * N,
        bytes_accessed=(M * K * x_itemsize + K * N * 2 + N * 4
                        + M * N * out_itemsize),
    )

    out2d = pl.pallas_call(
        _swin_intermediate_kernel,
        out_shape=jax.ShapeDtypeStruct((M, N), out_dtype),
        grid_spec=pltpu.PrefetchScalarGridSpec(
            num_scalar_prefetch=0,
            grid=(grid_m,),
            in_specs=[
                pl.BlockSpec((tm, K), lambda i: (i, 0)),   # row tile of x
                pl.BlockSpec((K, N), lambda i: (0, 0)),    # weight, resident
                pl.BlockSpec((1, N), lambda i: (0, 0)),    # bias, resident
            ],
            out_specs=pl.BlockSpec((tm, N), lambda i: (i, 0)),
        ),
        compiler_params=pltpu.CompilerParams(
            dimension_semantics=("parallel",),
            vmem_limit_bytes=vmem_limit,
        ),
        cost_estimate=cost,
    )(x2d, w_bf16, b2d)

    return out2d.reshape(B, S, N)


if __name__ == "__main__":
    # Small, module-consistent shapes: batch=2, seq=8 tokens, dim=32, mlp_ratio=4.
    B, S, DIM = 2, 8, 32
    MLP_RATIO = 4
    HIDDEN = MLP_RATIO * DIM  # 128

    key = jax.random.PRNGKey(0)
    kx, kw, kb = jax.random.split(key, 3)

    hidden_states = jax.random.normal(kx, (B, S, DIM), dtype=jnp.float32)
    # nn.Linear(dim, hidden): weight [hidden, dim]; we store its transpose [dim, hidden].
    weight = (jax.random.normal(kw, (DIM, HIDDEN), dtype=jnp.float32)
              * (1.0 / jnp.sqrt(DIM)))
    bias = jax.random.normal(kb, (HIDDEN,), dtype=jnp.float32) * 0.02

    out = swin_intermediate(hidden_states, weight, bias)
    out = jax.block_until_ready(out)

    # Pure-JAX reference (exact GELU, f32). Kernel uses bf16 MXU operands with
    # f32 accumulation, so tolerance reflects that precision tradeoff.
    ref = jax.nn.gelu(hidden_states @ weight + bias, approximate=False)
    assert out.shape == (B, S, HIDDEN)
    assert jnp.allclose(out, ref, atol=3e-2, rtol=3e-2), (
        float(jnp.max(jnp.abs(out - ref))))

    print("KERNEL_OK")
</pallas_src>

<mosaic_0001>
module attributes {stable_mosaic.version = 11 : i64} {
  func.func @_swin_intermediate_kernel(%arg0: i32, %arg1: memref<8x32xf32, #tpu.memory_space<vmem>>, %arg2: memref<32x128xbf16, #tpu.memory_space<vmem>>, %arg3: memref<1x128xf32, #tpu.memory_space<vmem>>, %arg4: memref<8x128xf32, #tpu.memory_space<vmem>>) attributes {dimension_semantics = [#tpu.dimension_semantics<parallel>], iteration_bounds = array<i64: 2>, scalar_prefetch = 0 : i64, scratch_operands = 0 : i64, tpu.core_type = #tpu.core_type<tc>, window_params = [{transform_indices = @transform_0, window_bounds = array<i64: 8, 32>}, {pipeline_mode = #tpu.pipeline_mode<synchronous>, transform_indices = @transform_1, window_bounds = array<i64: 32, 128>}, {pipeline_mode = #tpu.pipeline_mode<synchronous>, transform_indices = @transform_2, window_bounds = array<i64: 1, 128>}, {transform_indices = @transform_3, window_bounds = array<i64: 8, 128>}]} {
    %c0 = arith.constant 0 : index
    %c0_0 = arith.constant 0 : index
    %0 = vector.load %arg1[%c0, %c0_0] : memref<8x32xf32, #tpu.memory_space<vmem>>, vector<8x32xf32>
    %1 = arith.truncf %0 : vector<8x32xf32> to vector<8x32xbf16>
    %c0_1 = arith.constant 0 : index
    %c0_2 = arith.constant 0 : index
    %2 = vector.load %arg2[%c0_1, %c0_2] : memref<32x128xbf16, #tpu.memory_space<vmem>>, vector<32x128xbf16>
    %cst = arith.constant dense<0.000000e+00> : vector<8x128xf32>
    %3 = tpu.matmul %1, %2, %cst {dimension_numbers = #tpu.dot_dimension_numbers<[1], [0], [0], [1], [0, 0, 1, 1], [], []>} : vector<8x32xbf16>, vector<32x128xbf16>, vector<8x128xf32> -> vector<8x128xf32>
    %c0_3 = arith.constant 0 : index
    %c0_4 = arith.constant 0 : index
    %4 = vector.load %arg3[%c0_3, %c0_4] : memref<1x128xf32, #tpu.memory_space<vmem>>, vector<1x128xf32>
    %5 = vector.broadcast %4 : vector<1x128xf32> to vector<8x128xf32>
    %6 = arith.addf %3, %5 : vector<8x128xf32>
    %cst_5 = arith.constant 5.000000e-01 : f32
    %7 = vector.broadcast %cst_5 : f32 to vector<8x128xf32>
    %8 = arith.mulf %7, %6 : vector<8x128xf32>
    %cst_6 = arith.constant 0.707106769 : f32
    %9 = vector.broadcast %cst_6 : f32 to vector<8x128xf32>
    %10 = arith.mulf %6, %9 : vector<8x128xf32>
    %11 = math.erf %10 : vector<8x128xf32>
    %cst_7 = arith.constant 1.000000e+00 : f32
    %12 = vector.broadcast %cst_7 : f32 to vector<8x128xf32>
    %13 = arith.addf %12, %11 : vector<8x128xf32>
    %14 = arith.mulf %8, %13 : vector<8x128xf32>
    %c0_8 = arith.constant 0 : index
    %c0_9 = arith.constant 0 : index
    %15 = vector.load %arg4[%c0_8, %c0_9] : memref<8x128xf32, #tpu.memory_space<vmem>>, vector<8x128xf32>
    tpu.vector_store %arg4[%c0_8, %c0_9], %14 {strides = array<i32>} : memref<8x128xf32, #tpu.memory_space<vmem>>, vector<8x128xf32>,
    return
  }
  func.func @transform_0(%arg0: i32) -> (i32, i32) {
    %c0_i32 = arith.constant 0 : i32
    %c0_i32_0 = arith.constant 0 : i32
    return %arg0, %c0_i32 : i32, i32
  }
  func.func @transform_1(%arg0: i32) -> (i32, i32) {
    %c0_i32 = arith.constant 0 : i32
    %c0_i32_0 = arith.constant 0 : i32
    %c0_i32_1 = arith.constant 0 : i32
    return %c0_i32, %c0_i32_0 : i32, i32
  }
  func.func @transform_2(%arg0: i32) -> (i32, i32) {
    %c0_i32 = arith.constant 0 : i32
    %c0_i32_0 = arith.constant 0 : i32
    %c0_i32_1 = arith.constant 0 : i32
    return %c0_i32, %c0_i32_0 : i32, i32
  }
  func.func @transform_3(%arg0: i32) -> (i32, i32) {
    %c0_i32 = arith.constant 0 : i32
    %c0_i32_0 = arith.constant 0 : i32
    return %arg0, %c0_i32 : i32, i32
  }
}

</mosaic_0001>

<llo_original>
// kernel: tpu_custom_call.1
$region0: #{tpu_custom_call.1}
  #allocation0 [shape = 'u32[]', space=smem, size = 0x4, offset = 0x4, fixed_abs, tag = 'smem constant byte address 0x4 - core index']
  #allocation1 [shape = 'u32[72,128]{1,0:T(1,128)}', space=vmem, size = 0x9000, scoped, tag = 'internal scratch']
  %s0 = inlined_call_operand.hbm [shape: f32[16,32], index: 0, kind: input, shape index: {}]
  %s1 = inlined_call_operand.hbm [shape: bf16[32,128], index: 1, kind: input, shape index: {}]
  %s2 = inlined_call_operand.vmem [shape: f32[1,128], index: 2, kind: input, shape index: {}]
  %s3 = inlined_call_operand.hbm [shape: f32[16,128], index: 3, kind: output, shape index: {}]
  %s4 = sld [smem:[#allocation0]]
  $region53: #{tpu_custom_call.1} parent=0
    _
  %s6 = ssub.s32 1, %s4
  %s7 = scalar_select 0, %s6, %s4
  $region1: #{tpu_custom_call.1} parent=0
    #allocation2 [shape = 'u8[8192]{0}', space=vmem, size = 0x2000, scoped, tag = 'input window, operand 0']
    #allocation3 [shape = 's32[2]{0}', space=sflag, size = 0x8, scoped, tag = 'scoped memory for tpu_custom_call.1']
    #allocation4 [shape = 's32[2]{0}', space=sflag, size = 0x8, scoped, tag = 'scoped memory for tpu_custom_call.1']
    #allocation5 [shape = 'u8[8192]{0}', space=vmem, size = 0x2000, scoped, tag = 'input window, operand 1, single buffered']
    #allocation6 [shape = 's32[1]{0}', space=sflag, size = 0x4, scoped, tag = 'scoped memory for tpu_custom_call.1']
    #allocation7 [shape = 'u8[8192]{0}', space=vmem, size = 0x2000, scoped, tag = 'output window, operand 0']
    %8 = vsyncpa [#allocation3], 0
    %s9 = scalar_lea.sflag [#allocation3], 1
    %10 = vsyncpa %s9, 0
    %11 = vsyncpa [#allocation6], 0
    %12 = vsyncpa [#allocation4], 0
    %s13 = scalar_lea.sflag [#allocation4], 1
    %14 = vsyncpa %s13, 0
    loop: start=0, step=1, limit=4
    $region2: #{tpu_custom_call.1} parent=1 // loop_pre_header
      _
    $region3: #{tpu_custom_call.1} parent=1 // loop_header
      %s16 = sphi 0, %s20
      %p17 = scmp.ge.s32.totalorder %s16, 4
      %s26 = sphi 0, %s28
      %s29 = sphi 0, %s26
      %s30 = sphi 0, %s29
      %s46 = sphi 0, %s30
      %s50 = sphi 0, %s50
      %s52 = sphi 0, %s50
      %s53 = sphi 0, %s52
      %s67 = sphi 0, %s53
      %s71 = sphi 0, %s71
      %s73 = sphi 0, %s71
      %s74 = sphi 0, %s73
      %s88 = sphi 0, %s74
      %s94 = sphi 0, %s96
      %s97 = sphi 0, %s94
      %s98 = sphi 0, %s97
      %s114 = sphi 0, %s98
    $region4: #{tpu_custom_call.1} parent=1 // loop_header_branch
      %19 = sbr.rel (%p17) target = $region8
    $region5: #{tpu_custom_call.1} parent=1 // loop_body
      %s21 = ssub.s32 %s16, 1
      %s22 = ssub.s32 %s16, 2
      %s23 = sadd.s32 %s16, 1
      %s24 = ssub.s32 %s16, %s23
      %p25 = scmp.eq.s32.totalorder %s24, 0
      %s27 = sadd.s32 %s26, 1
      %s28 = scalar_select %p25, %s26, %s27
      %p31 = pneg %p25
      %p32 = scmp.eq.s32.totalorder %s16, 1
      %p33 = por %p31, %p32
      %p34 = scmp.ne.s32.totalorder %s26, %s29
      %p35 = scmp.eq.s32.totalorder %s16, 0
      %p36 = por %p34, %p35
      %p37 = scmp.ne.s32.totalorder %s26, %s29
      %p38 = scmp.eq.s32.totalorder %s21, 1
      %p39 = por %p37, %p38
      %p40 = scmp.ne.s32.totalorder %s29, %s30
      %p41 = scmp.eq.s32.totalorder %s21, 0
      %p42 = por %p40, %p41
      %p43 = scmp.ne.s32.totalorder %s29, %s30
      %p44 = scmp.eq.s32.totalorder %s22, 1
      %p45 = por %p43, %p44
      %p47 = scmp.ne.s32.totalorder %s30, %s46
      %p48 = scmp.eq.s32.totalorder %s22, 0
      %p49 = por %p47, %p48
      %s51 = sadd.s32 %s50, 1
      %p54 = scmp.eq.s32.totalorder %s16, 1
      %p55 = scmp.ne.s32.totalorder %s50, %s52
      %p56 = scmp.eq.s32.totalorder %s16, 0
      %p57 = por %p55, %p56
      %p58 = scmp.ne.s32.totalorder %s50, %s52
      %p59 = scmp.eq.s32.totalorder %s21, 1
      %p60 = por %p58, %p59
      %p61 = scmp.ne.s32.totalorder %s52, %s53
      %p62 = scmp.eq.s32.totalorder %s21, 0
      %p63 = por %p61, %p62
      %p64 = scmp.ne.s32.totalorder %s52, %s53
      %p65 = scmp.eq.s32.totalorder %s22, 1
      %p66 = por %p64, %p65
      %p68 = scmp.ne.s32.totalorder %s53, %s67
      %p69 = scmp.eq.s32.totalorder %s22, 0
      %p70 = por %p68, %p69
      %s72 = sadd.s32 %s71, 1
      %p75 = scmp.eq.s32.totalorder %s16, 1
      %p76 = scmp.ne.s32.totalorder %s71, %s73
      %p77 = scmp.eq.s32.totalorder %s16, 0
      %p78 = por %p76, %p77
      %p79 = scmp.ne.s32.totalorder %s71, %s73
      %p80 = scmp.eq.s32.totalorder %s21, 1
      %p81 = por %p79, %p80
      %p82 = scmp.ne.s32.totalorder %s73, %s74
      %p83 = scmp.eq.s32.totalorder %s21, 0
      %p84 = por %p82, %p83
      %p85 = scmp.ne.s32.totalorder %s73, %s74
      %p86 = scmp.eq.s32.totalorder %s22, 1
      %p87 = por %p85, %p86
      %p89 = scmp.ne.s32.totalorder %s74, %s88
      %p90 = scmp.eq.s32.totalorder %s22, 0
      %p91 = por %p89, %p90
      %s92 = ssub.s32 %s16, %s23
      %p93 = scmp.eq.s32.totalorder %s92, 0
      %s95 = sadd.s32 %s94, 1
      %s96 = scalar_select %p93, %s94, %s95
      %p99 = pneg %p93
      %p100 = scmp.eq.s32.totalorder %s16, 1
      %p101 = por %p99, %p100
      %p102 = scmp.ne.s32.totalorder %s94, %s97
      %p103 = scmp.eq.s32.totalorder %s16, 0
      %p104 = por %p102, %p103
      %p105 = scmp.ne.s32.totalorder %s94, %s97
      %p106 = scmp.eq.s32.totalorder %s21, 1
      %p107 = por %p105, %p106
      %p108 = scmp.ne.s32.totalorder %s97, %s98
      %p109 = scmp.eq.s32.totalorder %s21, 0
      %p110 = por %p108, %p109
      %p111 = scmp.ne.s32.totalorder %s97, %s98
      %p112 = scmp.eq.s32.totalorder %s22, 1
      %p113 = por %p111, %p112
      %p115 = scmp.ne.s32.totalorder %s98, %s114
      %p116 = scmp.eq.s32.totalorder %s22, 0
      %p117 = por %p115, %p116
      %p118 = scmp.le.s32.totalorder 1, %s16
      %p119 = scmp.lt.s32.totalorder %s16, 3
      %p120 = pnand %p118, %p119
      %p121 = pneg %p120
      // Predicated region
      $region9: #{tpu_custom_call.1} parent=5 // pred_check
        _
      $region10: #{tpu_custom_call.1} parent=5 // pred_check_branch
        %123 = sbr.rel (%p120) target = $region12
      $region11: #{tpu_custom_call.1} parent=5 // pred_region
        %s124 = ssub.s32 %s16, 1
        // Predicated region
        $region13: #{tpu_custom_call.1} parent=11 // pred_check
          %p125 = pneg %p63
        $region14: #{tpu_custom_call.1} parent=11 // pred_check_branch
          %127 = sbr.rel (%p125) target = $region16
        $region15: #{tpu_custom_call.1} parent=11 // pred_region
          %129 = vsyncadd [#allocation6], 0
          %s130 = sshll.u32 %s1, 4
          %s131 = int_to_ptr.hbm [resolvable:$true] %s130
          %s132 = sshll.u32 [#allocation5], 4
          %s133 = int_to_ptr.vmem [resolvable:$true] %s132
          %138 = dma.hbm_to_vmem [thread:$0]  %s131, 256, %s133, [#allocation6], 64, 64, 4
        $region16: #{tpu_custom_call.1} parent=11 // pred_fallthru
          _
        // Predicated region
        $region17: #{tpu_custom_call.1} parent=11 // pred_check
          %p139 = pneg %p84
        $region18: #{tpu_custom_call.1} parent=11 // pred_check_branch
          %141 = sbr.rel (%p139) target = $region20
        $region19: #{tpu_custom_call.1} parent=11 // pred_region
          _
        $region20: #{tpu_custom_call.1} parent=11 // pred_fallthru
          _
      $region12: #{tpu_custom_call.1} parent=5 // pred_fallthru
        _
      %p142 = scmp.lt.s32.totalorder %s16, 2
      // Predicated region
      $region21: #{tpu_custom_call.1} parent=5 // pred_check
        %p143 = pneg %p142
      $region22: #{tpu_custom_call.1} parent=5 // pred_check_branch
        %145 = sbr.rel (%p143) target = $region24
      $region23: #{tpu_custom_call.1} parent=5 // pred_region
        // Predicated region
        $region25: #{tpu_custom_call.1} parent=23 // pred_check
          %p146 = pneg %p36
        $region26: #{tpu_custom_call.1} parent=23 // pred_check_branch
          %148 = sbr.rel (%p146) target = $region28
        $region27: #{tpu_custom_call.1} parent=23 // pred_region
          %s149 = sand.u32 %s26, 1
          %s150 = scalar_lea.sflag [#allocation3], %s149
          %s151 = sand.u32 %s26, 1
          %s152 = smul.addr %s151, 8
          %s153 = scalar_lea.vmem [#allocation2], %s152
          %155 = vsyncadd %s150, 0
          %s156 = smul.addr %s16, 8
          %s157 = scalar_lea.hbm %s0, %s156
          %s159 = sshll.u32 %s157, 4
          %s160 = int_to_ptr.hbm [resolvable:$true] %s159
          %s161 = sshll.u32 %s153, 4
          %s162 = int_to_ptr.vmem [resolvable:$true] %s161
          %164 = dma.hbm_to_vmem [thread:$0]  %s160, 128, %s162, %s150
        $region28: #{tpu_custom_call.1} parent=23 // pred_fallthru
          _
      $region24: #{tpu_custom_call.1} parent=5 // pred_fallthru
        _
      %p165 = scmp.le.s32.totalorder 1, %s16
      %p166 = scmp.lt.s32.totalorder %s16, 3
      %p167 = pnand %p165, %p166
      %p168 = pneg %p167
      // Predicated region
      $region29: #{tpu_custom_call.1} parent=5 // pred_check
        _
      $region30: #{tpu_custom_call.1} parent=5 // pred_check_branch
        %170 = sbr.rel (%p167) target = $region32
      $region31: #{tpu_custom_call.1} parent=5 // pred_region
        %s171 = ssub.s32 %s16, 1
        %s172 = sand.u32 %s29, 1
        %s173 = scalar_lea.sflag [#allocation3], %s172
        %s174 = sand.u32 %s29, 1
        %s175 = smul.addr %s174, 8
        %s176 = scalar_lea.vmem [#allocation2], %s175
        // Predicated region
        $region33: #{tpu_custom_call.1} parent=31 // pred_check
          %p177 = pneg %p42
        $region34: #{tpu_custom_call.1} parent=31 // pred_check_branch
          %179 = sbr.rel (%p177) target = $region36
        $region35: #{tpu_custom_call.1} parent=31 // pred_region
          %181 = dma.done %s173, 128
        $region36: #{tpu_custom_call.1} parent=31 // pred_fallthru
          _
        // Predicated region
        $region37: #{tpu_custom_call.1} parent=31 // pred_check
          %p182 = pneg %p63
        $region38: #{tpu_custom_call.1} parent=31 // pred_check_branch
          %184 = sbr.rel (%p182) target = $region40
        $region39: #{tpu_custom_call.1} parent=31 // pred_region
          %186 = dma.done [#allocation6], 256
        $region40: #{tpu_custom_call.1} parent=31 // pred_fallthru
          _
        %s187 = sand.u32 %s29, 1
        %s188 = scalar_lea.sflag [#allocation3], %s187
        %s189 = sand.u32 %s29, 1
        %s190 = smul.addr %s189, 8
        %s191 = scalar_lea.vmem [#allocation2], %s190
        %p192 = pneg %p42
        %p193 = pneg %p39
        %p194 = pneg %p63
        %p195 = pneg %p60
        %p196 = pneg %p84
        %p197 = pneg %p81
        %p198 = pneg %p110
        %p199 = pneg %p107
        %s200 = sand.u32 %s97, 1
        %s201 = scalar_lea.sflag [#allocation4], %s200
        %s202 = sand.u32 %s97, 1
        %s203 = smul.addr %s202, 8
        %s204 = scalar_lea.vmem [#allocation7], %s203
        %v206 = vld [vmem:[%s176] sm:$0xff]
        %v207 = vpack.c.bf16 %v206, %v206
        %v208 = vld [vmem:[#allocation5] sm:$0xf]
        %v209 = vld [vmem:[#allocation5 + $0x4] sm:$0xf]
        %v210 = vld [vmem:[#allocation5 + $0x8] sm:$0xf]
        %v211 = vld [vmem:[#allocation5 + $0xc] sm:$0xf]
        %v212 = vld [vmem:[%s2] sm:$0x1]
        %v214 = vperm.slane %v212, 0
        %v220 = vunpack.c.l.b16 %v208
        %v221 = vunpack.c.l.b16 %v209
        %v222 = vunpack.c.l.b16 %v210
        %v223 = vunpack.c.l.b16 %v211
        %v224 = vpack.c.b16 %v221, %v220
        %v225 = vpack.c.b16 %v223, %v222
        %vm228 = vcmask 261120
        %v230 = vsel %vm228, %v207, 0
        %232 = vmatpush.bf16.msra.mxu0 0
        %233 = vmatpush.bf16.msra.mxu0 0
        %234 = vmatpush.bf16.msra.mxu0 0
        %235 = vmatpush.bf16.msra.mxu0 0
        %236 = vmatpush.bf16.msra.mxu0 0
        %237 = vmatpush.bf16.msra.mxu0 0
        %238 = vmatpush.bf16.msra.mxu0 %v225
        %239 = vmatpush.bf16.msra.mxu0 %v224
        %240 = vmatmul.bf16.gmra.mxu0 %v230
        %v241 = vpop.f32.mrf.mxu0
        %v242 = vadd.f32 %v214, %v241
        %v243 = vpop.f32.mrf.mxu0
        %244 = vdwg.mxu0
        %v245 = vmul.f32 %v242, 0.5
        %v246 = vmul.f32 %v242, 0.70710677
        %v247 = vmul.f32 %v246, %v246
        %v248 = vmin.f32 16.0, %v247
        %v249 = vmul.f32 %v248, 2.1237322e-06
        %v250 = vadd.f32 %v249, 0.00028619796
        %v251 = vmul.f32 %v248, %v250
        %v252 = vadd.f32 %v251, 0.0036580483
        %v253 = vmul.f32 %v248, %v252
        %v254 = vadd.f32 %v253, 0.05243302
        %v255 = vmul.f32 %v248, %v254
        %v256 = vadd.f32 %v255, 0.18741608
        %v257 = vmul.f32 %v248, %v256
        %v258 = vadd.f32 %v257, 1.1283791
        %v259 = vmul.f32 %v246, %v258
        %v260 = vmul.f32 %v248, 3.8918573e-05
        %v261 = vadd.f32 %v260, 0.001143296
        %v262 = vmul.f32 %v248, %v261
        %v263 = vadd.f32 %v262, 0.014752088
        %v264 = vmul.f32 %v248, %v263
        %v265 = vadd.f32 %v264, 0.112945676
        %v266 = vmul.f32 %v248, %v265
        %v267 = vadd.f32 %v266, 0.4994258
        %v268 = vmul.f32 %v248, %v267
        %v269 = vadd.f32 %v268, 1.0
        %v270 = vrcp.pop %v269
        %v271 = vmul.f32 %v269, %v270
        %v272 = vsub.f32 1.0, %v271
        %v273 = vmul.f32 %v270, %v272
        %v274 = vadd.f32 %v270, %v273
        %vm275 = vweird.f32 %v269
        %vm276 = vweird.f32 %v270
        %vm277 = vmor %vm275, %vm276
        %v278 = vsel %vm277, %v270, %v274
        %v279 = vand.u32 2147483647, %v269
        %vm280 = vcmp.eq.f32.partialorder %v279, 8.507059e+37
        %v281 = vand.u32 %v269, 2147483648
        %v282 = vor.u32 1.1754944e-38, %v281
        %v283 = vsel %vm280, %v282, %v278
        %v284 = vmul.f32 %v259, %v283
        %v285 = vmin.f32 %v284, 1.0
        %v286 = vmax.f32 %v285, -1.0
        %v287 = vadd.f32 %v286, 1.0
        %v288 = vmul.f32 %v245, %v287
        %289 = vst [vmem:[%s204] sm:$0xff] %v288
        %s290 = sand.u32 %s97, 1
        %s291 = scalar_lea.sflag [#allocation4], %s290
        %s292 = sand.u32 %s97, 1
        %s293 = smul.addr %s292, 8
        %s294 = scalar_lea.vmem [#allocation7], %s293
        // Predicated region
        $region41: #{tpu_custom_call.1} parent=31 // pred_check
          %p295 = pneg %p107
        $region42: #{tpu_custom_call.1} parent=31 // pred_check_branch
          %297 = sbr.rel (%p295) target = $region44
        $region43: #{tpu_custom_call.1} parent=31 // pred_region
          %299 = vsyncadd %s291, 0
          %s300 = smul.addr %s21, 8
          %s301 = scalar_lea.hbm %s3, %s300
          %s303 = sshll.u32 %s294, 4
          %s304 = int_to_ptr.vmem [resolvable:$true] %s303
          %s305 = sshll.u32 %s301, 4
          %s306 = int_to_ptr.hbm [resolvable:$true] %s305
          %308 = dma.vmem_to_hbm [thread:$0]  %s304, 128, %s306, %s291
        $region44: #{tpu_custom_call.1} parent=31 // pred_fallthru
          _
      $region32: #{tpu_custom_call.1} parent=5 // pred_fallthru
        _
      %p309 = scmp.le.s32.totalorder 2, %s16
      // Predicated region
      $region45: #{tpu_custom_call.1} parent=5 // pred_check
        %p310 = pneg %p309
      $region46: #{tpu_custom_call.1} parent=5 // pred_check_branch
        %312 = sbr.rel (%p310) target = $region48
      $region47: #{tpu_custom_call.1} parent=5 // pred_region
        %s313 = ssub.s32 %s16, 2
        // Predicated region
        $region49: #{tpu_custom_call.1} parent=47 // pred_check
          %p314 = pneg %p113
        $region50: #{tpu_custom_call.1} parent=47 // pred_check_branch
          %316 = sbr.rel (%p314) target = $region52
        $region51: #{tpu_custom_call.1} parent=47 // pred_region
          %s317 = sand.u32 %s98, 1
          %s318 = scalar_lea.sflag [#allocation4], %s317
          %s319 = sand.u32 %s98, 1
          %s320 = smul.addr %s319, 8
          %s321 = scalar_lea.vmem [#allocation7], %s320
          %323 = dma.done %s318, 128
        $region52: #{tpu_custom_call.1} parent=47 // pred_fallthru
          _
      $region48: #{tpu_custom_call.1} parent=5 // pred_fallthru
        _
    $region6: #{tpu_custom_call.1} parent=1 // loop_footer
      %s20 = sadd.s32 1, %s16
    $region7: #{tpu_custom_call.1} parent=1 // loop_footer_branch
      %15 = sbr.rel target = $region3
    $region8: #{tpu_custom_call.1} parent=1 // loop_exit
      _
    %324 = vsyncpa [#allocation3], 1
    %s325 = scalar_lea.sflag [#allocation3], 1
    %326 = vsyncpa %s325, 1
    %327 = vsyncpa [#allocation6], 1
    %328 = vsyncpa [#allocation4], 1
    %s329 = scalar_lea.sflag [#allocation4], 1
    %330 = vsyncpa %s329, 1

</llo_original>
